<compile_context>
chip_gen: v5e
topology: v5e:2x2
jax: 0.10.0
libtpu: 0.0.40
codegen_flags: <defaults>
</compile_context>

<pallas_src>
import functools

import jax
import jax.numpy as jnp
from jax.experimental import pallas as pl
from jax.experimental.pallas import tpu as pltpu

HIDDEN = 32
HA = 40          # augmented hidden dim: 32 + ones-carrier row, padded to 8
LANES = 128


def mss_kernel(x_ref, a1_ref, a2_ref, a3_ref, o_ref, *, tc):
    # x_ref : (2, TM)  bf16   row 0 = x, row 1 = 1.0   (samples in lanes)
    # a1_ref: (HA, 2)  bf16   [W1 | b1] + ones-carrier row
    # a2_ref: (HA, HA) bf16   [W2 | b2] + ones-carrier
    # a3_ref: (1, HA)  bf16   [W3 | b3]
    # o_ref : (1, TM)  f32
    a1 = a1_ref[...]
    a2 = a2_ref[...]
    a3 = a3_ref[...]

    tm = x_ref.shape[1]
    n_inner = tm // tc            # static

    @pl.loop(0, n_inner)
    def _(c):
        off = pl.multiple_of(c * tc, LANES)
        xa = x_ref[:, pl.ds(off, tc)]                              # (2, tc) bf16

        # Layer 1: Linear(1,32)+ReLU on the MXU ([W1|b1] @ [x;1]); the
        # ones-carrier row of a1 makes h1[32,:] == 1 for the next layer.
        h1 = jnp.dot(a1, xa, preferred_element_type=jnp.float32)   # (HA, tc) f32
        h1 = jnp.maximum(h1, 0.0).astype(jnp.bfloat16)

        # Layer 2: Linear(32,32)+ReLU on the MXU, bias folded via the carrier.
        h2 = jnp.dot(a2, h1, preferred_element_type=jnp.float32)   # (HA, tc) f32
        h2 = jnp.maximum(h2, 0.0).astype(jnp.bfloat16)

        # Layer 3: Linear(32,1) on the MXU (bias folded).
        z = jnp.dot(a3, h2, preferred_element_type=jnp.float32)    # (1, tc) f32

        # Sigmoid: exp on the EUP, approximate reciprocal on the EUP.
        prob = pl.reciprocal(1.0 + jnp.exp(-z), approx=True)       # (1, tc) f32
        o_ref[:, pl.ds(off, tc)] = prob


def _round_up(a, b):
    return ((a + b - 1) // b) * b


def mss_classifier(x, params, *, tm=131072, tc=2048):
    """x: (N, 1) float32. params in torch nn.Linear (out, in) layout. -> (N, 1)."""
    N = x.shape[0]
    assert x.ndim == 2 and x.shape[1] == 1

    # ---- tile geometry ----------------------------------------------------
    n_pad = _round_up(max(N, 1), LANES)          # pad only to 128, not to tm
    tc = max((tc // LANES) * LANES, LANES)
    tm = max((tm // tc) * tc, tc)
    if n_pad >= 2 * tc:
        # Keep at least 2 grid steps so ("parallel",) feeds both v7x cores.
        tm = min(tm, _round_up(-(-n_pad // 2), tc))
    else:
        tm = tc
    tc = min(tc, tm)
    grid = (pl.cdiv(n_pad, tm),)                 # ragged last block handled by Pallas

    # ---- augmented input: row 0 = x, row 1 = 1 (ones-carrier for the biases)
    # Single fused cast/stack/pad pass over x (pad amount <= 127 lanes).
    x_row = x[:, 0].astype(jnp.bfloat16)
    xa = jnp.stack([x_row, jnp.ones_like(x_row)], axis=0)          # (2, N)
    if n_pad != N:
        xa = jnp.pad(xa, ((0, 0), (0, n_pad - N)))                 # (2, n_pad)

    # ---- bias-augmented weights (bf16 MXU operands, f32 accumulation) -----
    a1 = jnp.zeros((HA, 2), jnp.float32)
    a1 = a1.at[0:HIDDEN, 0].set(params["W1"][:, 0])
    a1 = a1.at[0:HIDDEN, 1].set(params["b1"])
    a1 = a1.at[HIDDEN, 1].set(1.0)               # ones-carrier row -> h1[32] == 1

    a2 = jnp.zeros((HA, HA), jnp.float32)
    a2 = a2.at[0:HIDDEN, 0:HIDDEN].set(params["W2"])
    a2 = a2.at[0:HIDDEN, HIDDEN].set(params["b2"])
    a2 = a2.at[HIDDEN, HIDDEN].set(1.0)          # carry the ones row forward

    a3 = jnp.zeros((1, HA), jnp.float32)
    a3 = a3.at[0, 0:HIDDEN].set(params["W3"][0, :])
    a3 = a3.at[0, HIDDEN].set(params["b3"][0])

    a1, a2, a3 = (t.astype(jnp.bfloat16) for t in (a1, a2, a3))

    kernel = functools.partial(mss_kernel, tc=tc)
    out = pl.pallas_call(
        kernel,
        out_shape=jax.ShapeDtypeStruct((1, n_pad), jnp.float32),
        grid_spec=pltpu.PrefetchScalarGridSpec(
            num_scalar_prefetch=0,
            grid=grid,
            in_specs=[
                pl.BlockSpec((2, tm), lambda i: (0, i)),       # [x; 1] lane-dense
                pl.BlockSpec((HA, 2), lambda i: (0, 0)),       # a1 (fetched once)
                pl.BlockSpec((HA, HA), lambda i: (0, 0)),      # a2
                pl.BlockSpec((1, HA), lambda i: (0, 0)),       # a3
            ],
            out_specs=pl.BlockSpec((1, tm), lambda i: (0, i)),
        ),
        compiler_params=pltpu.CompilerParams(
            dimension_semantics=("parallel",),
            vmem_limit_bytes=32 * 1024 * 1024,
        ),
        cost_estimate=pl.CostEstimate(
            flops=2 * (HA * 2 + HA * HA + HA) * n_pad,
            transcendentals=2 * n_pad,
            bytes_accessed=8 * n_pad + (HA * 2 + HA * HA + HA) * 2,
        ),
    )(xa, a1, a2, a3)

    return out[0, :N].reshape(N, 1)


def init_params(key):
    """torch.nn.Linear-style init (uniform +/- 1/sqrt(fan_in)), torch layout."""
    k1, k2, k3, k4, k5, k6 = jax.random.split(key, 6)

    def uniform(k, shape, fan_in):
        bound = 1.0 / jnp.sqrt(jnp.float32(fan_in))
        return jax.random.uniform(k, shape, jnp.float32, -bound, bound)

    return {
        "W1": uniform(k1, (HIDDEN, 1), 1),       # (out, in)
        "b1": uniform(k2, (HIDDEN,), 1),
        "W2": uniform(k3, (HIDDEN, HIDDEN), HIDDEN),
        "b2": uniform(k4, (HIDDEN,), HIDDEN),
        "W3": uniform(k5, (1, HIDDEN), HIDDEN),
        "b3": uniform(k6, (1,), HIDDEN),
    }


def reference_forward(x, p):
    h1 = jax.nn.relu(x @ p["W1"].T + p["b1"])
    h2 = jax.nn.relu(h1 @ p["W2"].T + p["b2"])
    return jax.nn.sigmoid(h2 @ p["W3"].T + p["b3"])


if __name__ == "__main__":
    key = jax.random.PRNGKey(0)
    kx, kp = jax.random.split(key)

    N = 1000  # not a multiple of 128: exercises the 128-lane pad tail
    x = jax.random.normal(kx, (N, 1), dtype=jnp.float32)
    params = init_params(kp)

    # Small demo tiles: grid of 2 blocks, 2 inner sub-chunks per block.
    out = mss_classifier(x, params, tm=512, tc=256)
    out = jax.block_until_ready(out)

    ref = reference_forward(x, params)
    assert out.shape == (N, 1)
    # bf16 MXU operands + approximate reciprocal -> loosened tolerance (per review).
    assert jnp.allclose(out, ref, atol=2e-2, rtol=2e-2), float(
        jnp.max(jnp.abs(out - ref)))

    print("KERNEL_OK")
</pallas_src>

<mosaic_0001>
module attributes {stable_mosaic.version = 11 : i64} {
  func.func @mss_kernel(%arg0: i32, %arg1: memref<2x512xbf16, #tpu.memory_space<vmem>>, %arg2: memref<40x2xbf16, #tpu.memory_space<vmem>>, %arg3: memref<40x40xbf16, #tpu.memory_space<vmem>>, %arg4: memref<1x40xbf16, #tpu.memory_space<vmem>>, %arg5: memref<1x512xf32, #tpu.memory_space<vmem>>) attributes {dimension_semantics = [#tpu.dimension_semantics<parallel>], iteration_bounds = array<i64: 2>, scalar_prefetch = 0 : i64, scratch_operands = 0 : i64, tpu.core_type = #tpu.core_type<tc>, window_params = [{transform_indices = @transform_0, window_bounds = array<i64: 2, 512>}, {pipeline_mode = #tpu.pipeline_mode<synchronous>, transform_indices = @transform_1, window_bounds = array<i64: 40, 2>}, {pipeline_mode = #tpu.pipeline_mode<synchronous>, transform_indices = @transform_2, window_bounds = array<i64: 40, 40>}, {pipeline_mode = #tpu.pipeline_mode<synchronous>, transform_indices = @transform_3, window_bounds = array<i64: 1, 40>}, {transform_indices = @transform_4, window_bounds = array<i64: 1, 512>}]} {
    %c0 = arith.constant 0 : index
    %c0_0 = arith.constant 0 : index
    %0 = vector.load %arg2[%c0, %c0_0] : memref<40x2xbf16, #tpu.memory_space<vmem>>, vector<40x2xbf16>
    %c0_1 = arith.constant 0 : index
    %c0_2 = arith.constant 0 : index
    %1 = vector.load %arg3[%c0_1, %c0_2] : memref<40x40xbf16, #tpu.memory_space<vmem>>, vector<40x40xbf16>
    %c0_3 = arith.constant 0 : index
    %c0_4 = arith.constant 0 : index
    %2 = vector.load %arg4[%c0_3, %c0_4] : memref<1x40xbf16, #tpu.memory_space<vmem>>, vector<1x40xbf16>
    %c0_i32 = arith.constant 0 : i32
    %c2_i32 = arith.constant 2 : i32
    %3 = arith.addi %c0_i32, %c2_i32 : i32
    %c1_i32 = arith.constant 1 : i32
    scf.for %arg6 = %c0_i32 to %3 step %c1_i32  : i32 {
      %c1_i32_6 = arith.constant 1 : i32
      %4 = arith.muli %arg6, %c1_i32_6 : i32
      %c0_i32_7 = arith.constant 0 : i32
      %5 = arith.addi %c0_i32_7, %4 : i32
      %c256_i32 = arith.constant 256 : i32
      %6 = arith.muli %5, %c256_i32 : i32
      %7 = tpu.assume_multiple %6, 128 : i32
      %c0_8 = arith.constant 0 : index
      %8 = arith.index_cast %7 : i32 to index
      %9 = vector.load %arg1[%c0_8, %8] : memref<2x512xbf16, #tpu.memory_space<vmem>>, vector<2x256xbf16>
      %cst = arith.constant dense<0.000000e+00> : vector<40x256xf32>
      %10 = tpu.matmul %0, %9, %cst {dimension_numbers = #tpu.dot_dimension_numbers<[1], [0], [0], [1], [0, 0, 1, 1], [], []>} : vector<40x2xbf16>, vector<2x256xbf16>, vector<40x256xf32> -> vector<40x256xf32>
      %cst_9 = arith.constant 0.000000e+00 : f32
      %11 = vector.broadcast %cst_9 : f32 to vector<40x256xf32>
      %12 = arith.maximumf %10, %11 : vector<40x256xf32>
      %13 = arith.truncf %12 : vector<40x256xf32> to vector<40x256xbf16>
      %cst_10 = arith.constant dense<0.000000e+00> : vector<40x256xf32>
      %14 = tpu.matmul %1, %13, %cst_10 {dimension_numbers = #tpu.dot_dimension_numbers<[1], [0], [0], [1], [0, 0, 1, 1], [], []>} : vector<40x40xbf16>, vector<40x256xbf16>, vector<40x256xf32> -> vector<40x256xf32>
      %cst_11 = arith.constant 0.000000e+00 : f32
      %15 = vector.broadcast %cst_11 : f32 to vector<40x256xf32>
      %16 = arith.maximumf %14, %15 : vector<40x256xf32>
      %17 = arith.truncf %16 : vector<40x256xf32> to vector<40x256xbf16>
      %cst_12 = arith.constant dense<0.000000e+00> : vector<1x256xf32>
      %18 = tpu.matmul %2, %17, %cst_12 {dimension_numbers = #tpu.dot_dimension_numbers<[1], [0], [0], [1], [0, 0, 1, 1], [], []>} : vector<1x40xbf16>, vector<40x256xbf16>, vector<1x256xf32> -> vector<1x256xf32>
      %cst_13 = arith.constant 0.000000e+00 : f32
      %19 = vector.broadcast %cst_13 : f32 to vector<1x256xf32>
      %20 = arith.subf %19, %18 : vector<1x256xf32>
      %21 = math.exp %20 : vector<1x256xf32>
      %cst_14 = arith.constant 1.000000e+00 : f32
      %22 = vector.broadcast %cst_14 : f32 to vector<1x256xf32>
      %23 = arith.addf %22, %21 : vector<1x256xf32>
      %24 = tpu.reciprocal %23 {approx = true} : vector<1x256xf32> -> vector<1x256xf32>
      %c0_15 = arith.constant 0 : index
      %25 = arith.index_cast %7 : i32 to index
      %26 = vector.load %arg5[%c0_15, %25] : memref<1x512xf32, #tpu.memory_space<vmem>>, vector<1x256xf32>
      tpu.vector_store %arg5[%c0_15, %25], %24 {strides = array<i32>} : memref<1x512xf32, #tpu.memory_space<vmem>>, vector<1x256xf32>,
    }
    %c2_i32_5 = arith.constant 2 : i32
    return
  }
  func.func @transform_0(%arg0: i32) -> (i32, i32) {
    %c0_i32 = arith.constant 0 : i32
    %c0_i32_0 = arith.constant 0 : i32
    return %c0_i32, %arg0 : i32, i32
  }
  func.func @transform_1(%arg0: i32) -> (i32, i32) {
    %c0_i32 = arith.constant 0 : i32
    %c0_i32_0 = arith.constant 0 : i32
    %c0_i32_1 = arith.constant 0 : i32
    return %c0_i32, %c0_i32_0 : i32, i32
  }
  func.func @transform_2(%arg0: i32) -> (i32, i32) {
    %c0_i32 = arith.constant 0 : i32
    %c0_i32_0 = arith.constant 0 : i32
    %c0_i32_1 = arith.constant 0 : i32
    return %c0_i32, %c0_i32_0 : i32, i32
  }
  func.func @transform_3(%arg0: i32) -> (i32, i32) {
    %c0_i32 = arith.constant 0 : i32
    %c0_i32_0 = arith.constant 0 : i32
    %c0_i32_1 = arith.constant 0 : i32
    return %c0_i32, %c0_i32_0 : i32, i32
  }
  func.func @transform_4(%arg0: i32) -> (i32, i32) {
    %c0_i32 = arith.constant 0 : i32
    %c0_i32_0 = arith.constant 0 : i32
    return %c0_i32, %arg0 : i32, i32
  }
}

</mosaic_0001>

<llo_original>
// kernel: tpu_custom_call.1
$region0: #{tpu_custom_call.1}
  #allocation0 [shape = 'u32[]', space=smem, size = 0x4, offset = 0x4, fixed_abs, tag = 'smem constant byte address 0x4 - core index']
  #allocation1 [shape = 'u32[72,128]{1,0:T(1,128)}', space=vmem, size = 0x9000, scoped, tag = 'internal scratch']
  %s0 = inlined_call_operand.hbm [shape: bf16[2,1024], index: 0, kind: input, shape index: {}]
  %s1 = inlined_call_operand.vmem [shape: bf16[40,2], index: 1, kind: input, shape index: {}]
  %s2 = inlined_call_operand.vmem [shape: bf16[40,40], index: 2, kind: input, shape index: {}]
  %s3 = inlined_call_operand.vmem [shape: bf16[1,40], index: 3, kind: input, shape index: {}]
  %s4 = inlined_call_operand.hbm [shape: f32[1,1024], index: 4, kind: output, shape index: {}]
  %s5 = sld [smem:[#allocation0]]
  $region60: #{tpu_custom_call.1} parent=0
    _
  %s7 = ssub.s32 1, %s5
  %s8 = scalar_select 0, %s7, %s5
  $region1: #{tpu_custom_call.1} parent=0
    #allocation2 [shape = 'u8[4096]{0}', space=vmem, size = 0x1000, scoped, tag = 'input window, operand 0']
    #allocation3 [shape = 's32[2]{0}', space=sflag, size = 0x8, scoped, tag = 'scoped memory for tpu_custom_call.1']
    #allocation4 [shape = 's32[2]{0}', space=sflag, size = 0x8, scoped, tag = 'scoped memory for tpu_custom_call.1']
    #allocation5 [shape = 'u8[4096]{0}', space=vmem, size = 0x1000, scoped, tag = 'output window, operand 0']
    %9 = vsyncpa [#allocation3], 0
    %s10 = scalar_lea.sflag [#allocation3], 1
    %11 = vsyncpa %s10, 0
    %12 = vsyncpa [#allocation4], 0
    %s13 = scalar_lea.sflag [#allocation4], 1
    %14 = vsyncpa %s13, 0
    loop: start=0, step=1, limit=4
    $region2: #{tpu_custom_call.1} parent=1 // loop_pre_header
      _
    $region3: #{tpu_custom_call.1} parent=1 // loop_header
      %s16 = sphi 0, %s20
      %p17 = scmp.ge.s32.totalorder %s16, 4
      %s26 = sphi 0, %s28
      %s29 = sphi 0, %s26
      %s30 = sphi 0, %s29
      %s46 = sphi 0, %s30
      %s50 = sphi 0, %s50
      %s52 = sphi 0, %s50
      %s53 = sphi 0, %s52
      %s67 = sphi 0, %s53
      %s71 = sphi 0, %s71
      %s73 = sphi 0, %s71
      %s74 = sphi 0, %s73
      %s88 = sphi 0, %s74
      %s92 = sphi 0, %s92
      %s94 = sphi 0, %s92
      %s95 = sphi 0, %s94
      %s109 = sphi 0, %s95
      %s115 = sphi 0, %s117
      %s118 = sphi 0, %s115
      %s119 = sphi 0, %s118
      %s135 = sphi 0, %s119
    $region4: #{tpu_custom_call.1} parent=1 // loop_header_branch
      %19 = sbr.rel (%p17) target = $region8
    $region5: #{tpu_custom_call.1} parent=1 // loop_body
      %s21 = ssub.s32 %s16, 1
      %s22 = ssub.s32 %s16, 2
      %s23 = sadd.s32 %s16, 1
      %s24 = ssub.s32 %s16, %s23
      %p25 = scmp.eq.s32.totalorder %s24, 0
      %s27 = sadd.s32 %s26, 1
      %s28 = scalar_select %p25, %s26, %s27
      %p31 = pneg %p25
      %p32 = scmp.eq.s32.totalorder %s16, 1
      %p33 = por %p31, %p32
      %p34 = scmp.ne.s32.totalorder %s26, %s29
      %p35 = scmp.eq.s32.totalorder %s16, 0
      %p36 = por %p34, %p35
      %p37 = scmp.ne.s32.totalorder %s26, %s29
      %p38 = scmp.eq.s32.totalorder %s21, 1
      %p39 = por %p37, %p38
      %p40 = scmp.ne.s32.totalorder %s29, %s30
      %p41 = scmp.eq.s32.totalorder %s21, 0
      %p42 = por %p40, %p41
      %p43 = scmp.ne.s32.totalorder %s29, %s30
      %p44 = scmp.eq.s32.totalorder %s22, 1
      %p45 = por %p43, %p44
      %p47 = scmp.ne.s32.totalorder %s30, %s46
      %p48 = scmp.eq.s32.totalorder %s22, 0
      %p49 = por %p47, %p48
      %s51 = sadd.s32 %s50, 1
      %p54 = scmp.eq.s32.totalorder %s16, 1
      %p55 = scmp.ne.s32.totalorder %s50, %s52
      %p56 = scmp.eq.s32.totalorder %s16, 0
      %p57 = por %p55, %p56
      %p58 = scmp.ne.s32.totalorder %s50, %s52
      %p59 = scmp.eq.s32.totalorder %s21, 1
      %p60 = por %p58, %p59
      %p61 = scmp.ne.s32.totalorder %s52, %s53
      %p62 = scmp.eq.s32.totalorder %s21, 0
      %p63 = por %p61, %p62
      %p64 = scmp.ne.s32.totalorder %s52, %s53
      %p65 = scmp.eq.s32.totalorder %s22, 1
      %p66 = por %p64, %p65
      %p68 = scmp.ne.s32.totalorder %s53, %s67
      %p69 = scmp.eq.s32.totalorder %s22, 0
      %p70 = por %p68, %p69
      %s72 = sadd.s32 %s71, 1
      %p75 = scmp.eq.s32.totalorder %s16, 1
      %p76 = scmp.ne.s32.totalorder %s71, %s73
      %p77 = scmp.eq.s32.totalorder %s16, 0
      %p78 = por %p76, %p77
      %p79 = scmp.ne.s32.totalorder %s71, %s73
      %p80 = scmp.eq.s32.totalorder %s21, 1
      %p81 = por %p79, %p80
      %p82 = scmp.ne.s32.totalorder %s73, %s74
      %p83 = scmp.eq.s32.totalorder %s21, 0
      %p84 = por %p82, %p83
      %p85 = scmp.ne.s32.totalorder %s73, %s74
      %p86 = scmp.eq.s32.totalorder %s22, 1
      %p87 = por %p85, %p86
      %p89 = scmp.ne.s32.totalorder %s74, %s88
      %p90 = scmp.eq.s32.totalorder %s22, 0
      %p91 = por %p89, %p90
      %s93 = sadd.s32 %s92, 1
      %p96 = scmp.eq.s32.totalorder %s16, 1
      %p97 = scmp.ne.s32.totalorder %s92, %s94
      %p98 = scmp.eq.s32.totalorder %s16, 0
      %p99 = por %p97, %p98
      %p100 = scmp.ne.s32.totalorder %s92, %s94
      %p101 = scmp.eq.s32.totalorder %s21, 1
      %p102 = por %p100, %p101
      %p103 = scmp.ne.s32.totalorder %s94, %s95
      %p104 = scmp.eq.s32.totalorder %s21, 0
      %p105 = por %p103, %p104
      %p106 = scmp.ne.s32.totalorder %s94, %s95
      %p107 = scmp.eq.s32.totalorder %s22, 1
      %p108 = por %p106, %p107
      %p110 = scmp.ne.s32.totalorder %s95, %s109
      %p111 = scmp.eq.s32.totalorder %s22, 0
      %p112 = por %p110, %p111
      %s113 = ssub.s32 %s16, %s23
      %p114 = scmp.eq.s32.totalorder %s113, 0
      %s116 = sadd.s32 %s115, 1
      %s117 = scalar_select %p114, %s115, %s116
      %p120 = pneg %p114
      %p121 = scmp.eq.s32.totalorder %s16, 1
      %p122 = por %p120, %p121
      %p123 = scmp.ne.s32.totalorder %s115, %s118
      %p124 = scmp.eq.s32.totalorder %s16, 0
      %p125 = por %p123, %p124
      %p126 = scmp.ne.s32.totalorder %s115, %s118
      %p127 = scmp.eq.s32.totalorder %s21, 1
      %p128 = por %p126, %p127
      %p129 = scmp.ne.s32.totalorder %s118, %s119
      %p130 = scmp.eq.s32.totalorder %s21, 0
      %p131 = por %p129, %p130
      %p132 = scmp.ne.s32.totalorder %s118, %s119
      %p133 = scmp.eq.s32.totalorder %s22, 1
      %p134 = por %p132, %p133
      %p136 = scmp.ne.s32.totalorder %s119, %s135
      %p137 = scmp.eq.s32.totalorder %s22, 0
      %p138 = por %p136, %p137
      %p139 = scmp.le.s32.totalorder 1, %s16
      %p140 = scmp.lt.s32.totalorder %s16, 3
      %p141 = pnand %p139, %p140
      %p142 = pneg %p141
      // Predicated region
      $region9: #{tpu_custom_call.1} parent=5 // pred_check
        _
      $region10: #{tpu_custom_call.1} parent=5 // pred_check_branch
        %144 = sbr.rel (%p141) target = $region12
      $region11: #{tpu_custom_call.1} parent=5 // pred_region
        %s145 = ssub.s32 %s16, 1
        // Predicated region
        $region13: #{tpu_custom_call.1} parent=11 // pred_check
          %p146 = pneg %p63
        $region14: #{tpu_custom_call.1} parent=11 // pred_check_branch
          %148 = sbr.rel (%p146) target = $region16
        $region15: #{tpu_custom_call.1} parent=11 // pred_region
          _
        $region16: #{tpu_custom_call.1} parent=11 // pred_fallthru
          _
        // Predicated region
        $region17: #{tpu_custom_call.1} parent=11 // pred_check
          %p149 = pneg %p84
        $region18: #{tpu_custom_call.1} parent=11 // pred_check_branch
          %151 = sbr.rel (%p149) target = $region20
        $region19: #{tpu_custom_call.1} parent=11 // pred_region
          _
        $region20: #{tpu_custom_call.1} parent=11 // pred_fallthru
          _
        // Predicated region
        $region21: #{tpu_custom_call.1} parent=11 // pred_check
          %p152 = pneg %p105
        $region22: #{tpu_custom_call.1} parent=11 // pred_check_branch
          %154 = sbr.rel (%p152) target = $region24
        $region23: #{tpu_custom_call.1} parent=11 // pred_region
          _
        $region24: #{tpu_custom_call.1} parent=11 // pred_fallthru
          _
      $region12: #{tpu_custom_call.1} parent=5 // pred_fallthru
        _
      %p155 = scmp.lt.s32.totalorder %s16, 2
      // Predicated region
      $region25: #{tpu_custom_call.1} parent=5 // pred_check
        %p156 = pneg %p155
      $region26: #{tpu_custom_call.1} parent=5 // pred_check_branch
        %158 = sbr.rel (%p156) target = $region28
      $region27: #{tpu_custom_call.1} parent=5 // pred_region
        // Predicated region
        $region29: #{tpu_custom_call.1} parent=27 // pred_check
          %p159 = pneg %p36
        $region30: #{tpu_custom_call.1} parent=27 // pred_check_branch
          %161 = sbr.rel (%p159) target = $region32
        $region31: #{tpu_custom_call.1} parent=27 // pred_region
          %s162 = sand.u32 %s26, 1
          %s163 = scalar_lea.sflag [#allocation3], %s162
          %s164 = sand.u32 %s26, 1
          %s165 = smul.addr %s164, 4
          %s166 = scalar_lea.vmem [#allocation2], %s165
          %s167 = smul.u32 4, %s16
          %169 = vsyncadd %s163, 0
          %s170 = scalar_lea.hbm %s0, %s167
          %s172 = sshll.u32 %s170, 4
          %s173 = int_to_ptr.hbm [resolvable:$true] %s172
          %s174 = sshll.u32 %s166, 4
          %s175 = int_to_ptr.vmem [resolvable:$true] %s174
          %177 = dma.hbm_to_vmem [thread:$0]  %s173, 64, %s175, %s163
        $region32: #{tpu_custom_call.1} parent=27 // pred_fallthru
          _
      $region28: #{tpu_custom_call.1} parent=5 // pred_fallthru
        _
      %p178 = scmp.le.s32.totalorder 1, %s16
      %p179 = scmp.lt.s32.totalorder %s16, 3
      %p180 = pnand %p178, %p179
      %p181 = pneg %p180
      // Predicated region
      $region33: #{tpu_custom_call.1} parent=5 // pred_check
        _
      $region34: #{tpu_custom_call.1} parent=5 // pred_check_branch
        %183 = sbr.rel (%p180) target = $region36
      $region35: #{tpu_custom_call.1} parent=5 // pred_region
        %s184 = ssub.s32 %s16, 1
        %s185 = sand.u32 %s29, 1
        %s186 = scalar_lea.sflag [#allocation3], %s185
        %s187 = sand.u32 %s29, 1
        %s188 = smul.addr %s187, 4
        %s189 = scalar_lea.vmem [#allocation2], %s188
        // Predicated region
        $region37: #{tpu_custom_call.1} parent=35 // pred_check
          %p190 = pneg %p42
        $region38: #{tpu_custom_call.1} parent=35 // pred_check_branch
          %192 = sbr.rel (%p190) target = $region40
        $region39: #{tpu_custom_call.1} parent=35 // pred_region
          %194 = dma.done %s186, 64
        $region40: #{tpu_custom_call.1} parent=35 // pred_fallthru
          _
        %s195 = sand.u32 %s29, 1
        %s196 = scalar_lea.sflag [#allocation3], %s195
        %s197 = sand.u32 %s29, 1
        %s198 = smul.addr %s197, 4
        %s199 = scalar_lea.vmem [#allocation2], %s198
        %p200 = pneg %p42
        %p201 = pneg %p39
        %p202 = pneg %p63
        %p203 = pneg %p60
        %p204 = pneg %p84
        %p205 = pneg %p81
        %p206 = pneg %p105
        %p207 = pneg %p102
        %p208 = pneg %p131
        %p209 = pneg %p128
        %s210 = sand.u32 %s118, 1
        %s211 = scalar_lea.sflag [#allocation4], %s210
        %s212 = sand.u32 %s118, 1
        %s213 = smul.addr %s212, 4
        %s214 = scalar_lea.vmem [#allocation5], %s213
        %s215 = smul.u32 4, %s21
        %s216 = smul.u32 4, %s21
        %v218 = vld [vmem:[%s1] sm:$0xf]
        %v219 = vld [vmem:[%s1 + $0x4] sm:$0xf]
        %v220 = vld [vmem:[%s1 + $0x8] sm:$0xf]
        %v221 = vld [vmem:[%s1 + $0xc] sm:$0xf]
        %v222 = vld [vmem:[%s1 + $0x10] sm:$0xf]
        %v223 = vld [vmem:[%s2] sm:$0xf]
        %v224 = vld [vmem:[%s2 + $0x4] sm:$0xf]
        %v225 = vld [vmem:[%s2 + $0x8] sm:$0xf]
        %v226 = vld [vmem:[%s2 + $0xc] sm:$0xf]
        %v227 = vld [vmem:[%s2 + $0x10] sm:$0xf]
        %v228 = vld [vmem:[%s3] sm:$0x1]
        loop: start=0, step=1, limit=2
        $region41: #{tpu_custom_call.1} parent=35 // loop_pre_header
          _
        $region42: #{tpu_custom_call.1} parent=35 // loop_header
          %s230 = sphi 0, %s234
          %p231 = scmp.ge.s32.totalorder %s230, 2
        $region43: #{tpu_custom_call.1} parent=35 // loop_header_branch
          %233 = sbr.rel (%p231) target = $region47
        $region44: #{tpu_custom_call.1} parent=35 // loop_body
          %s235 = smul.u32 %s230, 256
          %s236 = sshra.s32 %s235, 7
          %s237 = sand.u32 %s235, 127
          %s238 = scalar_lea.vmem %s189, %s236 [#allocation2]
          %v239 = vld [vmem:[%s238] sm:$0x3]
          %v245 = vunpack.c.l.b16 %v218
          %v246 = vunpack.c.l.b16 %v219
          %v247 = vunpack.c.l.b16 %v220
          %v248 = vunpack.c.l.b16 %v221
          %v249 = vunpack.c.l.b16 %v222
          %v250 = vpack.c.b16 %v246, %v245
          %v251 = vpack.c.b16 %v248, %v247
          %v252 = vpack.c.b16 %v249, %v249
          %254 = vst [vmem:[#allocation1] ss:$9 sm:$0xff] %v239
          %v255 = vld [vmem:[#allocation1] sm:$0xff]
          %v256 = vld [vmem:[#allocation1 + $0x9] sm:$0xff]
          %vm257 = vcmask 15360
          %v259 = vsel %vm257, %v250, 0
          %v262 = vsel %vm257, %v251, 0
          %v265 = vsel %vm257, %v252, 0
          %vm267 = vcmask 1040384
          %v268 = vsel %vm267, %v255, 0
          %v270 = vsel %vm267, %v256, 0
          %272 = vmatpush.bf16.msra.mxu0 0
          %273 = vmatpush.bf16.msra.mxu0 0
          %274 = vmatpush.bf16.msra.mxu0 0
          %275 = vmatpush.bf16.msra.mxu0 0
          %276 = vmatpush.bf16.msra.mxu0 0
          %277 = vmatpush.bf16.msra.mxu0 0
          %278 = vmatpush.bf16.msra.mxu0 0
          %279 = vmatpush.bf16.msra.mxu0 %v268
          %280 = vmatmul.bf16.gmra.mxu0 %v259
          %v281 = vpop.f32.mrf.mxu0
          %v282 = vadd.f32 0.0, %v281
          %v283 = vpop.f32.mrf.mxu0
          %v284 = vadd.f32 0.0, %v283
          %285 = vmatmul.bf16.gmra.mxu0 %v262
          %v286 = vpop.f32.mrf.mxu0
          %v287 = vadd.f32 0.0, %v286
          %v288 = vpop.f32.mrf.mxu0
          %v289 = vadd.f32 0.0, %v288
          %290 = vmatmul.bf16.gmra.mxu0 %v265
          %v291 = vpop.f32.mrf.mxu0
          %v292 = vadd.f32 0.0, %v291
          %v293 = vpop.f32.mrf.mxu0
          %294 = vdwg.mxu0
          %295 = vmatpush.bf16.msra.mxu0 0
          %296 = vmatpush.bf16.msra.mxu0 0
          %297 = vmatpush.bf16.msra.mxu0 0
          %298 = vmatpush.bf16.msra.mxu0 0
          %299 = vmatpush.bf16.msra.mxu0 0
          %300 = vmatpush.bf16.msra.mxu0 0
          %301 = vmatpush.bf16.msra.mxu0 0
          %302 = vmatpush.bf16.msra.mxu0 %v270
          %303 = vmatmul.bf16.gmra.mxu0 %v259
          %v304 = vpop.f32.mrf.mxu0
          %v305 = vadd.f32 0.0, %v304
          %v306 = vpop.f32.mrf.mxu0
          %v307 = vadd.f32 0.0, %v306
          %308 = vmatmul.bf16.gmra.mxu0 %v262
          %v309 = vpop.f32.mrf.mxu0
          %v310 = vadd.f32 0.0, %v309
          %v311 = vpop.f32.mrf.mxu0
          %v312 = vadd.f32 0.0, %v311
          %313 = vmatmul.bf16.gmra.mxu0 %v265
          %v314 = vpop.f32.mrf.mxu0
          %v315 = vadd.f32 0.0, %v314
          %v316 = vpop.f32.mrf.mxu0
          %317 = vdwg.mxu0
          %v318 = vmax.f32 %v282, 0.0
          %v319 = vmax.f32 %v305, 0.0
          %v320 = vmax.f32 %v284, 0.0
          %v321 = vmax.f32 %v307, 0.0
          %v322 = vmax.f32 %v287, 0.0
          %v323 = vmax.f32 %v310, 0.0
          %v324 = vmax.f32 %v289, 0.0
          %v325 = vmax.f32 %v312, 0.0
          %v326 = vmax.f32 %v292, 0.0
          %v327 = vmax.f32 %v315, 0.0
          %v328 = vpack.c.bf16 %v320, %v318
          %v329 = vpack.c.bf16 %v321, %v319
          %v330 = vpack.c.bf16 %v324, %v322
          %v331 = vpack.c.bf16 %v325, %v323
          %v332 = vpack.c.bf16 %v326, %v326
          %v333 = vpack.c.bf16 %v327, %v327
          %v339 = vunpack.c.l.b16 %v223
          %v340 = vunpack.c.l.b16 %v224
          %v341 = vunpack.c.l.b16 %v225
          %v342 = vunpack.c.l.b16 %v226
          %v343 = vunpack.c.l.b16 %v227
          %v344 = vpack.c.b16 %v340, %v339
          %v345 = vpack.c.b16 %v342, %v341
          %v346 = vpack.c.b16 %v343, %v343
          %vm347 = vcmask 326656
          %v349 = vsel %vm347, %v344, 0
          %v352 = vsel %vm347, %v345, 0
          %v355 = vsel %vm347, %v346, 0
          %vm357 = vcmask 1043456
          %v359 = vsel %vm357, %v332, 0
          %v362 = vsel %vm357, %v333, 0
          %364 = vmatpush.bf16.msra.mxu0 0
          %365 = vmatpush.bf16.msra.mxu0 0
          %366 = vmatpush.bf16.msra.mxu0 0
          %367 = vmatpush.bf16.msra.mxu0 0
          %368 = vmatpush.bf16.msra.mxu0 0
          %369 = vmatpush.bf16.msra.mxu0 %v359
          %370 = vmatpush.bf16.msra.mxu0 %v330
          %371 = vmatpush.bf16.msra.mxu0 %v328
          %372 = vmatmul.bf16.gmra.mxu0 %v349
          %v373 = vpop.f32.mrf.mxu0
          %v374 = vadd.f32 0.0, %v373
          %v375 = vpop.f32.mrf.mxu0
          %v376 = vadd.f32 0.0, %v375
          %377 = vmatmul.bf16.gmra.mxu0 %v352
          %v378 = vpop.f32.mrf.mxu0
          %v379 = vadd.f32 0.0, %v378
          %v380 = vpop.f32.mrf.mxu0
          %v381 = vadd.f32 0.0, %v380
          %382 = vmatmul.bf16.gmra.mxu0 %v355
          %v383 = vpop.f32.mrf.mxu0
          %v384 = vadd.f32 0.0, %v383
          %v385 = vpop.f32.mrf.mxu0
          %386 = vdwg.mxu0
          %387 = vmatpush.bf16.msra.mxu0 0
          %388 = vmatpush.bf16.msra.mxu0 0
          %389 = vmatpush.bf16.msra.mxu0 0
          %390 = vmatpush.bf16.msra.mxu0 0
          %391 = vmatpush.bf16.msra.mxu0 0
          %392 = vmatpush.bf16.msra.mxu0 %v362
          %393 = vmatpush.bf16.msra.mxu0 %v331
          %394 = vmatpush.bf16.msra.mxu0 %v329
          %395 = vmatmul.bf16.gmra.mxu0 %v349
          %v396 = vpop.f32.mrf.mxu0
          %v397 = vadd.f32 0.0, %v396
          %v398 = vpop.f32.mrf.mxu0
          %v399 = vadd.f32 0.0, %v398
          %400 = vmatmul.bf16.gmra.mxu0 %v352
          %v401 = vpop.f32.mrf.mxu0
          %v402 = vadd.f32 0.0, %v401
          %v403 = vpop.f32.mrf.mxu0
          %v404 = vadd.f32 0.0, %v403
          %405 = vmatmul.bf16.gmra.mxu0 %v355
          %v406 = vpop.f32.mrf.mxu0
          %v407 = vadd.f32 0.0, %v406
          %v408 = vpop.f32.mrf.mxu0
          %409 = vdwg.mxu0
          %v410 = vmax.f32 %v374, 0.0
          %v411 = vmax.f32 %v397, 0.0
          %v412 = vmax.f32 %v376, 0.0
          %v413 = vmax.f32 %v399, 0.0
          %v414 = vmax.f32 %v379, 0.0
          %v415 = vmax.f32 %v402, 0.0
          %v416 = vmax.f32 %v381, 0.0
          %v417 = vmax.f32 %v404, 0.0
          %v418 = vmax.f32 %v384, 0.0
          %v419 = vmax.f32 %v407, 0.0
          %v420 = vpack.c.bf16 %v412, %v410
          %v421 = vpack.c.bf16 %v413, %v411
          %v422 = vpack.c.bf16 %v416, %v414
          %v423 = vpack.c.bf16 %v417, %v415
          %v424 = vpack.c.bf16 %v418, %v418
          %v425 = vpack.c.bf16 %v419, %v419
          %v427 = vsel %vm347, %v228, 0
          %v430 = vsel %vm357, %v424, 0
          %v433 = vsel %vm357, %v425, 0
          %435 = vmatpush.bf16.msra.mxu0 0
          %436 = vmatpush.bf16.msra.mxu0 0
          %437 = vmatpush.bf16.msra.mxu0 0
          %438 = vmatpush.bf16.msra.mxu0 0
          %439 = vmatpush.bf16.msra.mxu0 0
          %440 = vmatpush.bf16.msra.mxu0 %v430
          %441 = vmatpush.bf16.msra.mxu0 %v422
          %442 = vmatpush.bf16.msra.mxu0 %v420
          %443 = vmatmul.bf16.gmra.mxu0 %v427
          %v444 = vpop.f32.mrf.mxu0
          %v445 = vadd.f32 0.0, %v444
          %v446 = vpop.f32.mrf.mxu0
          %447 = vdwg.mxu0
          %448 = vmatpush.bf16.msra.mxu0 0
          %449 = vmatpush.bf16.msra.mxu0 0
          %450 = vmatpush.bf16.msra.mxu0 0
          %451 = vmatpush.bf16.msra.mxu0 0
          %452 = vmatpush.bf16.msra.mxu0 0
          %453 = vmatpush.bf16.msra.mxu0 %v433
          %454 = vmatpush.bf16.msra.mxu0 %v423
          %455 = vmatpush.bf16.msra.mxu0 %v421
          %456 = vmatmul.bf16.gmra.mxu0 %v427
          %v457 = vpop.f32.mrf.mxu0
          %v458 = vadd.f32 0.0, %v457
          %v459 = vpop.f32.mrf.mxu0
          %460 = vdwg.mxu0
          %v461 = vsub.f32 0.0, %v445
          %v462 = vsub.f32 0.0, %v458
          %v463 = vmul.f32 %v461, 1.442695
          %v464 = vpow.pop %v463
          %v465 = vmul.f32 %v462, 1.442695
          %v466 = vpow.pop %v465
          %v467 = vadd.f32 %v464, 1.0
          %v468 = vadd.f32 %v466, 1.0
          %v469 = vrcp.pop %v467
          %v470 = vrcp.pop %v468
          %v473 = vrot.slane %v470, 7
          %v474 = vsel %vm267, %v469, %v473
          %s476 = scalar_lea.vmem %s214, %s236 [#allocation5]
          %v477 = vlaneseq
          %vm478 = vcmp.ge.s32.totalorder %v477, 0
          %vm479 = vcmp.lt.s32.totalorder %v477, 256
          %vm480 = vmand %vm478, %vm479
          %481 = vst.msk [vmem:[%s476] sm:$0x3] %vm480, %v474
        $region45: #{tpu_custom_call.1} parent=35 // loop_footer
          %s234 = sadd.s32 1, %s230
        $region46: #{tpu_custom_call.1} parent=35 // loop_footer_branch
          %229 = sbr.rel target = $region42
        $region47: #{tpu_custom_call.1} parent=35 // loop_exit
          _
        %s482 = sand.u32 %s118, 1
        %s483 = scalar_lea.sflag [#allocation4], %s482
        %s484 = sand.u32 %s118, 1
        %s485 = smul.addr %s484, 4
        %s486 = scalar_lea.vmem [#allocation5], %s485
        // Predicated region
        $region48: #{tpu_custom_call.1} parent=35 // pred_check
          %p487 = pneg %p128
        $region49: #{tpu_custom_call.1} parent=35 // pred_check_branch
          %489 = sbr.rel (%p487) target = $region51
        $region50: #{tpu_custom_call.1} parent=35 // pred_region
          %s490 = smul.u32 4, %s21
          %492 = vsyncadd %s483, 0
          %s493 = scalar_lea.hbm %s4, %s490
          %s495 = sshll.u32 %s486, 4
          %s496 = int_to_ptr.vmem [resolvable:$true] %s495
          %s497 = sshll.u32 %s493, 4
          %s498 = int_to_ptr.hbm [resolvable:$true] %s497
          %500 = dma.vmem_to_hbm [thread:$0]  %s496, 64, %s498, %s483
        $region51: #{tpu_custom_call.1} parent=35 // pred_fallthru
          _
      $region36: #{tpu_custom_call.1} parent=5 // pred_fallthru
        _
      %p501 = scmp.le.s32.totalorder 2, %s16
      // Predicated region
      $region52: #{tpu_custom_call.1} parent=5 // pred_check
        %p502 = pneg %p501
      $region53: #{tpu_custom_call.1} parent=5 // pred_check_branch
        %504 = sbr.rel (%p502) target = $region55
      $region54: #{tpu_custom_call.1} parent=5 // pred_region
        %s505 = ssub.s32 %s16, 2
        // Predicated region
        $region56: #{tpu_custom_call.1} parent=54 // pred_check
          %p506 = pneg %p134
        $region57: #{tpu_custom_call.1} parent=54 // pred_check_branch
          %508 = sbr.rel (%p506) target = $region59
        $region58: #{tpu_custom_call.1} parent=54 // pred_region
          %s509 = sand.u32 %s119, 1
          %s510 = scalar_lea.sflag [#allocation4], %s509
          %s511 = sand.u32 %s119, 1
          %s512 = smul.addr %s511, 4
          %s513 = scalar_lea.vmem [#allocation5], %s512
          %515 = dma.done %s510, 64
        $region59: #{tpu_custom_call.1} parent=54 // pred_fallthru
          _
      $region55: #{tpu_custom_call.1} parent=5 // pred_fallthru
        _
    $region6: #{tpu_custom_call.1} parent=1 // loop_footer
      %s20 = sadd.s32 1, %s16
    $region7: #{tpu_custom_call.1} parent=1 // loop_footer_branch
      %15 = sbr.rel target = $region3
    $region8: #{tpu_custom_call.1} parent=1 // loop_exit
      _
    %516 = vsyncpa [#allocation3], 1
    %s517 = scalar_lea.sflag [#allocation3], 1
    %518 = vsyncpa %s517, 1
    %519 = vsyncpa [#allocation4], 1
    %s520 = scalar_lea.sflag [#allocation4], 1
    %521 = vsyncpa %s520, 1

</llo_original>
